<compile_context>
chip_gen: v6e
topology: v6e:2x2x1
jax: 0.10.0
libtpu: 0.0.40
codegen_flags: <defaults>
</compile_context>

<pallas_src>
import functools

import jax
import jax.numpy as jnp
from jax.experimental import pallas as pl
from jax.experimental.pallas import tpu as pltpu


def _kl_loss_kernel(t_ref, s_ref, o_ref, *, n_rows, tile_rows):
    i = pl.program_id(0)
    t = t_ref[...].astype(jnp.float32)   # teacher logits (TN, C)
    s = s_ref[...].astype(jnp.float32)   # student logits (TN, C)

    # softmax(features_t, dim=1) pieces, numerically stable.
    t_max = jnp.max(t, axis=1, keepdims=True)
    t_shift = t - t_max
    t_exp = jnp.exp(t_shift)
    t_sum = jnp.sum(t_exp, axis=1, keepdims=True)
    inv_t_sum = pl.reciprocal(t_sum, approx=False)   # exact: matches ref tol
    log_t_sum = jnp.log(t_sum)

    # log_softmax(features_s, dim=1): only the per-row LSE is needed.
    s_max = jnp.max(s, axis=1, keepdims=True)
    s_lse = jnp.log(jnp.sum(jnp.exp(s - s_max), axis=1, keepdims=True)) + s_max

    # KL term  p_t * (log p_t - log q_s)
    #   = (t_exp / t_sum) * ((t_shift - s) + (s_lse - log_t_sum))
    # Factor 1/t_sum out of the column sum: one fewer (TN, C) multiply; the
    # reciprocal multiply happens on the (TN, 1) row vector instead.
    pointwise = t_exp * ((t_shift - s) + (s_lse - log_t_sum))
    row_kl = jnp.sum(pointwise, axis=1, keepdims=True) * inv_t_sum   # (TN, 1)

    # Mask rows past the real end of the array (partial last row-block) so the
    # global divisor N*C stays correct and padded garbage never leaks.
    row_ids = i * tile_rows + jax.lax.broadcasted_iota(
        jnp.int32, row_kl.shape, 0)
    row_kl = jnp.where(row_ids < n_rows, row_kl, 0.0)

    # Lane-dense write of this block's partial sum (wrapper reads lane 0).
    partial = jnp.sum(row_kl)
    o_ref[...] = jnp.broadcast_to(partial, o_ref.shape).astype(jnp.float32)


def _choose_tile_rows(n_rows, n_cols):
    # Working set per row-tile: 2 inputs x 2 pipeline buffers x C x 4 B plus
    # ~5 live f32 (TN, C) temporaries in the body.  Keep it under ~20 MiB so
    # it sits comfortably inside a 32 MiB scoped-VMEM limit on every
    # generation (v7x only has 64 MiB physical VMEM).
    budget_bytes = 20 * 1024 * 1024
    bytes_per_row = n_cols * 4 * (2 * 2 + 5)
    tn = budget_bytes // max(bytes_per_row, 1)
    tn = max(8, min(1024, (tn // 8) * 8))
    if tn >= n_rows:
        return n_rows           # single block == full row dim (always legal)
    return tn                   # multiple of 8 when tiling


def kl_loss(features_t, features_s, *, tile_rows=None):
    assert features_t.shape == features_s.shape
    assert features_t.ndim == 2
    N, C = features_t.shape
    TN = tile_rows if tile_rows is not None else _choose_tile_rows(N, C)
    G = pl.cdiv(N, TN)

    itemsize = jnp.dtype(features_t.dtype).itemsize
    cost = pl.CostEstimate(
        flops=8 * N * C,
        transcendentals=2 * N * C,
        bytes_accessed=2 * N * C * itemsize + G * 128 * 4,
    )

    kernel = functools.partial(_kl_loss_kernel, n_rows=N, tile_rows=TN)
    partials = pl.pallas_call(
        kernel,
        out_shape=jax.ShapeDtypeStruct((G, 1, 128), jnp.float32),
        grid=(G,),
        in_specs=[
            pl.BlockSpec((TN, C), lambda i: (i, 0)),
            pl.BlockSpec((TN, C), lambda i: (i, 0)),
        ],
        out_specs=pl.BlockSpec((1, 1, 128), lambda i: (i, 0, 0)),
        compiler_params=pltpu.CompilerParams(
            dimension_semantics=("parallel",),
            vmem_limit_bytes=32 * 1024 * 1024,
        ),
        cost_estimate=cost,
    )(features_t, features_s)

    # reduction='mean': divide by total element count N*C (PyTorch semantics).
    return jnp.sum(partials[:, 0, 0]) / jnp.float32(N * C)


def _kl_loss_ref(features_t, features_s):
    # Pure-JAX reference mirroring F.kl_div(log_softmax(s), softmax(t), 'mean')
    log_q = jax.nn.log_softmax(features_s.astype(jnp.float32), axis=1)
    p = jax.nn.softmax(features_t.astype(jnp.float32), axis=1)
    log_p = jax.nn.log_softmax(features_t.astype(jnp.float32), axis=1)
    return jnp.mean(p * (log_p - log_q))


if __name__ == "__main__":
    key = jax.random.PRNGKey(0)
    k_t, k_s = jax.random.split(key)

    # Small logits consistent with the module: batch=8, classes=32.
    N, C = 8, 32
    features_t = jax.random.normal(k_t, (N, C), dtype=jnp.float32)
    features_s = jax.random.normal(k_s, (N, C), dtype=jnp.float32)

    loss = jax.block_until_ready(kl_loss(features_t, features_s))
    ref = jax.block_until_ready(_kl_loss_ref(features_t, features_s))
    assert jnp.allclose(loss, ref, rtol=1e-5, atol=1e-6), (loss, ref)

    # Exercise the multi-block + partial-last-tile (row-masking) path.
    N2, C2, TN2 = 20, 32, 8
    k_t2, k_s2 = jax.random.split(k_s)
    t2 = jax.random.normal(k_t2, (N2, C2), dtype=jnp.float32)
    s2 = jax.random.normal(k_s2, (N2, C2), dtype=jnp.float32)
    loss2 = jax.block_until_ready(kl_loss(t2, s2, tile_rows=TN2))
    ref2 = jax.block_until_ready(_kl_loss_ref(t2, s2))
    assert jnp.allclose(loss2, ref2, rtol=1e-5, atol=1e-6), (loss2, ref2)

    # Exercise a lane-aligned multi-block pipelined path (evenly divisible).
    N3, C3, TN3 = 512, 128, 128
    k_t3, k_s3 = jax.random.split(k_s2)
    t3 = jax.random.normal(k_t3, (N3, C3), dtype=jnp.float32)
    s3 = jax.random.normal(k_s3, (N3, C3), dtype=jnp.float32)
    loss3 = jax.block_until_ready(kl_loss(t3, s3, tile_rows=TN3))
    ref3 = jax.block_until_ready(_kl_loss_ref(t3, s3))
    assert jnp.allclose(loss3, ref3, rtol=1e-5, atol=1e-6), (loss3, ref3)

    print("KERNEL_OK")
</pallas_src>

<mosaic_0001>
module attributes {stable_mosaic.version = 11 : i64} {
  func.func @_kl_loss_kernel(%arg0: i32, %arg1: memref<8x32xf32, #tpu.memory_space<vmem>>, %arg2: memref<8x32xf32, #tpu.memory_space<vmem>>, %arg3: memref<1x1x128xf32, #tpu.memory_space<vmem>>) attributes {dimension_semantics = [#tpu.dimension_semantics<parallel>], iteration_bounds = array<i64: 1>, scalar_prefetch = 0 : i64, scratch_operands = 0 : i64, tpu.core_type = #tpu.core_type<tc>, window_params = [{transform_indices = @transform_0, window_bounds = array<i64: 8, 32>}, {transform_indices = @transform_1, window_bounds = array<i64: 8, 32>}, {transform_indices = @transform_2, window_bounds = array<i64: 1, 1, 128>}]} {
    %c0 = arith.constant 0 : index
    %c0_0 = arith.constant 0 : index
    %0 = vector.load %arg1[%c0, %c0_0] : memref<8x32xf32, #tpu.memory_space<vmem>>, vector<8x32xf32>
    %c0_1 = arith.constant 0 : index
    %c0_2 = arith.constant 0 : index
    %1 = vector.load %arg2[%c0_1, %c0_2] : memref<8x32xf32, #tpu.memory_space<vmem>>, vector<8x32xf32>
    %cst = arith.constant dense<0xFF800000> : vector<8xf32>
    %2 = vector.multi_reduction <maximumf>, %0, %cst [1] : vector<8x32xf32> to vector<8xf32>
    %3 = vector.shape_cast %2 : vector<8xf32> to vector<8x1xf32>
    %4 = vector.broadcast %3 : vector<8x1xf32> to vector<8x32xf32>
    %5 = arith.subf %0, %4 : vector<8x32xf32>
    %6 = math.exp %5 : vector<8x32xf32>
    %cst_3 = arith.constant dense<0.000000e+00> : vector<8xf32>
    %7 = vector.multi_reduction <add>, %6, %cst_3 [1] : vector<8x32xf32> to vector<8xf32>
    %8 = vector.shape_cast %7 : vector<8xf32> to vector<8x1xf32>
    %9 = tpu.reciprocal %8 : vector<8x1xf32> -> vector<8x1xf32>
    %10 = math.log %8 : vector<8x1xf32>
    %cst_4 = arith.constant dense<0xFF800000> : vector<8xf32>
    %11 = vector.multi_reduction <maximumf>, %1, %cst_4 [1] : vector<8x32xf32> to vector<8xf32>
    %12 = vector.shape_cast %11 : vector<8xf32> to vector<8x1xf32>
    %13 = vector.broadcast %12 : vector<8x1xf32> to vector<8x32xf32>
    %14 = arith.subf %1, %13 : vector<8x32xf32>
    %15 = math.exp %14 : vector<8x32xf32>
    %cst_5 = arith.constant dense<0.000000e+00> : vector<8xf32>
    %16 = vector.multi_reduction <add>, %15, %cst_5 [1] : vector<8x32xf32> to vector<8xf32>
    %17 = vector.shape_cast %16 : vector<8xf32> to vector<8x1xf32>
    %18 = math.log %17 : vector<8x1xf32>
    %19 = arith.addf %18, %12 : vector<8x1xf32>
    %20 = arith.subf %5, %1 : vector<8x32xf32>
    %21 = arith.subf %19, %10 : vector<8x1xf32>
    %22 = vector.broadcast %21 : vector<8x1xf32> to vector<8x32xf32>
    %23 = arith.addf %20, %22 : vector<8x32xf32>
    %24 = arith.mulf %6, %23 : vector<8x32xf32>
    %cst_6 = arith.constant dense<0.000000e+00> : vector<8xf32>
    %25 = vector.multi_reduction <add>, %24, %cst_6 [1] : vector<8x32xf32> to vector<8xf32>
    %26 = vector.shape_cast %25 : vector<8xf32> to vector<8x1xf32>
    %27 = arith.mulf %26, %9 : vector<8x1xf32>
    %c8_i32 = arith.constant 8 : i32
    %28 = arith.muli %arg0, %c8_i32 : i32
    %29 = tpu.iota {dimensions = array<i32: 0>} : vector<8x1xi32>
    %30 = vector.broadcast %28 : i32 to vector<8x1xi32>
    %31 = arith.addi %30, %29 : vector<8x1xi32>
    %c8_i32_7 = arith.constant 8 : i32
    %32 = vector.broadcast %c8_i32_7 : i32 to vector<8x1xi32>
    %33 = arith.cmpi slt, %31, %32 : vector<8x1xi32>
    %cst_8 = arith.constant 0.000000e+00 : f32
    %34 = vector.broadcast %cst_8 : f32 to vector<8x1xf32>
    %35 = arith.select %33, %27, %34 : vector<8x1xi1>, vector<8x1xf32>
    %36 = vector.shape_cast %35 : vector<8x1xf32> to vector<1x8x1xf32>
    %cst_9 = arith.constant dense<0.000000e+00> : vector<1xf32>
    %37 = vector.multi_reduction <add>, %36, %cst_9 [1, 2] : vector<1x8x1xf32> to vector<1xf32>
    %38 = vector.shape_cast %37 : vector<1xf32> to vector<1x1x1xf32>
    %39 = vector.extract %38[0, 0, 0] : f32 from vector<1x1x1xf32>
    %40 = vector.broadcast %39 : f32 to vector<1x1x128xf32>
    %c0_10 = arith.constant 0 : index
    %c0_11 = arith.constant 0 : index
    %c0_12 = arith.constant 0 : index
    %41 = vector.load %arg3[%c0_10, %c0_11, %c0_12] : memref<1x1x128xf32, #tpu.memory_space<vmem>>, vector<1x1x128xf32>
    tpu.vector_store %arg3[%c0_10, %c0_11, %c0_12], %40 {strides = array<i32>} : memref<1x1x128xf32, #tpu.memory_space<vmem>>, vector<1x1x128xf32>,
    return
  }
  func.func @transform_0(%arg0: i32) -> (i32, i32) {
    %c0_i32 = arith.constant 0 : i32
    %c0_i32_0 = arith.constant 0 : i32
    return %arg0, %c0_i32 : i32, i32
  }
  func.func @transform_1(%arg0: i32) -> (i32, i32) {
    %c0_i32 = arith.constant 0 : i32
    %c0_i32_0 = arith.constant 0 : i32
    return %arg0, %c0_i32 : i32, i32
  }
  func.func @transform_2(%arg0: i32) -> (i32, i32, i32) {
    %c0_i32 = arith.constant 0 : i32
    %c0_i32_0 = arith.constant 0 : i32
    %c0_i32_1 = arith.constant 0 : i32
    return %arg0, %c0_i32, %c0_i32_0 : i32, i32, i32
  }
}

</mosaic_0001>

<llo_original>
// kernel: tpu_custom_call.1
$region0: #{tpu_custom_call.1}
  #allocation0 [shape = 'u32[]', space=smem, size = 0x4, offset = 0x4, fixed_abs, tag = 'smem constant byte address 0x4 - core index']
  #allocation1 [shape = 'u32[144,128]{1,0:T(1,128)}', space=vmem, size = 0x12000, scoped, tag = 'internal scratch']
  %s0 = inlined_call_operand.hbm [shape: f32[8,32], index: 0, kind: input, shape index: {}]
  %s1 = inlined_call_operand.hbm [shape: f32[8,32], index: 1, kind: input, shape index: {}]
  %s2 = inlined_call_operand.hbm [shape: f32[1,1,128], index: 2, kind: output, shape index: {}]
  %s3 = sld [smem:[#allocation0]]
  $region26: #{tpu_custom_call.1} parent=0
    _
  %s5 = ssub.s32 1, %s3
  %s6 = scalar_select 0, %s5, %s3
  $region1: #{tpu_custom_call.1} parent=0
    #allocation2 [shape = 'u8[4096]{0}', space=vmem, size = 0x1000, scoped, tag = 'input window, operand 0, single buffered']
    #allocation3 [shape = 's32[1]{0}', space=sflag, size = 0x4, scoped, tag = 'scoped memory for tpu_custom_call.1']
    #allocation4 [shape = 's32[1]{0}', space=sflag, size = 0x4, scoped, tag = 'scoped memory for tpu_custom_call.1']
    #allocation5 [shape = 'u8[4096]{0}', space=vmem, size = 0x1000, scoped, tag = 'input window, operand 1, single buffered']
    #allocation6 [shape = 's32[1]{0}', space=sflag, size = 0x4, scoped, tag = 'scoped memory for tpu_custom_call.1']
    #allocation7 [shape = 'u8[512]{0}', space=vmem, size = 0x400, scoped, tag = 'output window, operand 0, single buffered']
    %7 = vsyncpa [#allocation3], 0
    %8 = vsyncpa [#allocation6], 0
    %9 = vsyncpa [#allocation4], 0
    // Predicated region
    $region2: #{tpu_custom_call.1} parent=1 // pred_check
      _
    $region3: #{tpu_custom_call.1} parent=1 // pred_check_branch
      %11 = sbr.rel (0) target = $region5
    $region4: #{tpu_custom_call.1} parent=1 // pred_region
      %s13 = ssub.s32 128, 128
      %14 = vsyncadd [#allocation3], %s13
      %s16 = sshll.u32 [#allocation2], 4
      %s17 = int_to_ptr.vmem [resolvable:$true] %s16
      %19 = dma.hbm_to_vmem [thread:$0]  %s0, 128, %s17, [#allocation3]
    $region5: #{tpu_custom_call.1} parent=1 // pred_fallthru
      _
    // Predicated region
    $region6: #{tpu_custom_call.1} parent=1 // pred_check
      _
    $region7: #{tpu_custom_call.1} parent=1 // pred_check_branch
      %21 = sbr.rel (0) target = $region9
    $region8: #{tpu_custom_call.1} parent=1 // pred_region
      %s23 = ssub.s32 128, 128
      %24 = vsyncadd [#allocation6], %s23
      %s26 = sshll.u32 [#allocation5], 4
      %s27 = int_to_ptr.vmem [resolvable:$true] %s26
      %29 = dma.hbm_to_vmem [thread:$0]  %s1, 128, %s27, [#allocation6]
    $region9: #{tpu_custom_call.1} parent=1 // pred_fallthru
      _
    // Predicated region
    $region10: #{tpu_custom_call.1} parent=1 // pred_check
      _
    $region11: #{tpu_custom_call.1} parent=1 // pred_check_branch
      %31 = sbr.rel (0) target = $region13
    $region12: #{tpu_custom_call.1} parent=1 // pred_region
      %32 = dma.done [#allocation3], 128
    $region13: #{tpu_custom_call.1} parent=1 // pred_fallthru
      _
    // Predicated region
    $region14: #{tpu_custom_call.1} parent=1 // pred_check
      _
    $region15: #{tpu_custom_call.1} parent=1 // pred_check_branch
      %34 = sbr.rel (0) target = $region17
    $region16: #{tpu_custom_call.1} parent=1 // pred_region
      %35 = dma.done [#allocation6], 128
    $region17: #{tpu_custom_call.1} parent=1 // pred_fallthru
      _
    %v36 = vld [vmem:[#allocation2] sm:$0xff]
    %v37 = vld [vmem:[#allocation5] sm:$0xff]
    %vm38 = vcmask 261120
    %v39 = vsel %vm38, %v36, -inf
    %40 = vmax.xlane.f32.xlu0 %v39
    %v41 = vpop.xlane.xlu0 %40
    %v42 = vsub.f32 %v36, %v41
    %v43 = vmul.f32 %v42, 1.442695
    %v44 = vpow.pop %v43
    %v45 = vsel %vm38, %v44, 0.0
    %46 = vadd.xlane.f32.xlu0 %v45
    %v47 = vpop.xlane.xlu0 %46
    %v48 = vrcp.pop %v47
    %v49 = vlog2.pop %v47
    %v50 = vmul.f32 %v49, 0.6931472
    %v51 = vsel %vm38, %v37, -inf
    %52 = vmax.xlane.f32.xlu0 %v51
    %v53 = vpop.xlane.xlu0 %52
    %v54 = vsub.f32 %v37, %v53
    %v55 = vmul.f32 %v54, 1.442695
    %v56 = vpow.pop %v55
    %v57 = vsel %vm38, %v56, 0.0
    %58 = vadd.xlane.f32.xlu0 %v57
    %v59 = vpop.xlane.xlu0 %58
    %v60 = vlog2.pop %v59
    %v61 = vmul.f32 %v60, 0.6931472
    %v62 = vadd.f32 %v61, %v53
    %v63 = vsub.f32 %v42, %v37
    %v64 = vsub.f32 %v62, %v50
    %v65 = vadd.f32 %v63, %v64
    %v66 = vmul.f32 %v44, %v65
    %v67 = vsel %vm38, %v66, 0.0
    %68 = vadd.xlane.f32.xlu0 %v67
    %v69 = vpop.xlane.xlu0 %68
    %v70 = vmul.f32 %v69, %v48
    %s71 = smul.u32 0, 8
    %v72 = vlaneseq
    %v73 = vshrl.u32 %v72, 7
    %v74 = vstv %s71
    %v75 = vadd.s32 %v74, %v73
    %vm76 = vcmp.lt.s32.totalorder %v75, 8
    %v77 = vsel %vm76, %v70, 0.0
    %vm78 = vcmask 7168
    %v79 = vsel %vm78, %v77, 0.0
    %80 = vadd.xlane.f32.xlu0 %v79
    %v81 = vpop.xlane.xlu0 %80
    %v82 = vrot.slane %v81, 4
    %v83 = vadd.f32 %v81, %v82
    %v84 = vrot.slane %v83, 2
    %v85 = vadd.f32 %v83, %v84
    %v86 = vrot.slane %v85, 1
    %v87 = vadd.f32 %v85, %v86
    %s88 = vtos %v87
    %v89 = vstv %s88
    %90 = vst [vmem:[#allocation7] sm:$0x1] %v89
    // Predicated region
    $region18: #{tpu_custom_call.1} parent=1 // pred_check
      _
    $region19: #{tpu_custom_call.1} parent=1 // pred_check_branch
      %92 = sbr.rel (0) target = $region21
    $region20: #{tpu_custom_call.1} parent=1 // pred_region
      %s94 = ssub.s32 16, 16
      %95 = vsyncadd [#allocation4], %s94
      %s97 = sshll.u32 [#allocation7], 4
      %s98 = int_to_ptr.vmem [resolvable:$true] %s97
      %100 = dma.vmem_to_hbm [thread:$0]  %s98, 16, %s2, [#allocation4]
    $region21: #{tpu_custom_call.1} parent=1 // pred_fallthru
      _
    // Predicated region
    $region22: #{tpu_custom_call.1} parent=1 // pred_check
      _
    $region23: #{tpu_custom_call.1} parent=1 // pred_check_branch
      %102 = sbr.rel (0) target = $region25
    $region24: #{tpu_custom_call.1} parent=1 // pred_region
      %103 = dma.done [#allocation4], 16
    $region25: #{tpu_custom_call.1} parent=1 // pred_fallthru
      _
    %104 = vsyncpa [#allocation3], 1
    %105 = vsyncpa [#allocation6], 1
    %106 = vsyncpa [#allocation4], 1

</llo_original>
